<compile_context>
chip_gen: v7x
topology: tpu7x:2x2x1
jax: 0.10.0
libtpu: 0.0.40
codegen_flags: <defaults>
</compile_context>

<pallas_src>
import jax
import jax.numpy as jnp
from jax.experimental import pallas as pl
from jax.experimental.pallas import tpu as pltpu

EPS = 1e-5
LANE = 128


def _round_up(x, m):
    return ((x + m - 1) // m) * m


# ---------------------------------------------------------------------------
# Fused multi-layer kernel: one grid step == one GCN layer.
# ---------------------------------------------------------------------------
def _encoder_kernel(x_ref, a_ref, p_ref, w_ref, b_ref, gamma_ref, beta_ref,
                    pool_ref, h_ref):
    layer = pl.program_id(0)

    # Layer 0 consumes the (channel-padded) input features; later layers use
    # the previous layer's BatchNorm output kept resident in VMEM scratch.
    @pl.when(layer == 0)
    def _():
        h_ref[...] = x_ref[...]

    xin = h_ref[...]                                     # (N, Dp) f32
    w = w_ref[0]                                         # (Dp, Dp) f32

    # GCNConv: A_norm @ (X W) + b.
    # Small (N,Dp)@(Dp,Dp) matmul stays f32; the dominant (N,N)@(N,Dp)
    # aggregation runs on the bf16 MXU path with f32 accumulation.
    xw = jnp.dot(xin, w, preferred_element_type=jnp.float32)
    h = jnp.dot(a_ref[...], xw.astype(jnp.bfloat16),
                preferred_element_type=jnp.float32)
    h = jnp.maximum(h + b_ref[0], 0.0)                   # bias + ReLU

    # BatchNorm1d (training-mode forward): node-axis stats, biased variance,
    # folded into one per-channel scale/shift.
    mean = jnp.mean(h, axis=0, keepdims=True)            # (1, Dp)
    diff = h - mean
    var = jnp.mean(diff * diff, axis=0, keepdims=True)
    inv_std = jax.lax.rsqrt(var + EPS)
    scale = gamma_ref[0] * inv_std
    shift = beta_ref[0] - mean * scale
    y = h * scale + shift

    h_ref[...] = y                                       # feeds next layer

    # global_add_pool: one-hot (G, N) @ (N, Dp) on the MXU.
    pool_ref[0] = jnp.dot(p_ref[...], y, preferred_element_type=jnp.float32)


def _run_encoder_impl(x_pad, a_bf16, pool_mat, w_all, b_all, gamma_all,
                      beta_all):
    num_layers, dpad, _ = w_all.shape
    n = x_pad.shape[0]
    g = pool_mat.shape[0]

    grid_spec = pltpu.PrefetchScalarGridSpec(
        num_scalar_prefetch=0,
        grid=(num_layers,),
        in_specs=[
            pl.BlockSpec((n, dpad), lambda l: (0, 0)),           # x (resident)
            pl.BlockSpec((n, n), lambda l: (0, 0)),              # A_norm bf16 (resident)
            pl.BlockSpec((g, n), lambda l: (0, 0)),              # pool one-hot (resident)
            pl.BlockSpec((1, dpad, dpad), lambda l: (l, 0, 0)),  # W_l
            pl.BlockSpec((1, 1, dpad), lambda l: (l, 0, 0)),     # b_l
            pl.BlockSpec((1, 1, dpad), lambda l: (l, 0, 0)),     # gamma_l
            pl.BlockSpec((1, 1, dpad), lambda l: (l, 0, 0)),     # beta_l
        ],
        out_specs=pl.BlockSpec((1, g, dpad), lambda l: (l, 0, 0)),
        scratch_shapes=[pltpu.VMEM((n, dpad), jnp.float32)],     # carried h
    )

    # Explicit VMEM budget (resident operands + double-buffered per-layer
    # slices), capped well below v7x's 64 MiB physical VMEM.
    resident_bytes = (x_pad.size * 4 + a_bf16.size * 2 + pool_mat.size * 4
                      + n * dpad * 4                        # h scratch
                      + 2 * (dpad * dpad + 3 * dpad) * 4    # per-layer params (2 bufs)
                      + 2 * g * dpad * 4)                   # pooled block (2 bufs)
    vmem_limit = int(min(max(4 * resident_bytes, 16 << 20), 48 << 20))

    return pl.pallas_call(
        _encoder_kernel,
        out_shape=jax.ShapeDtypeStruct((num_layers, g, dpad), jnp.float32),
        grid_spec=grid_spec,
        compiler_params=pltpu.CompilerParams(
            dimension_semantics=("arbitrary",),  # h carried layer-to-layer
            vmem_limit_bytes=vmem_limit),
    )(x_pad, a_bf16, pool_mat, w_all, b_all, gamma_all, beta_all)


_run_encoder = jax.jit(_run_encoder_impl)


# ---------------------------------------------------------------------------
# Plain-JAX glue (graph preprocessing, parameter packing).
# ---------------------------------------------------------------------------
def build_normalized_adjacency(edge_index, num_nodes):
    """Dense D^{-1/2} (A + I) D^{-1/2} from edge_index (2, E)."""
    src, dst = edge_index[0], edge_index[1]
    a = jnp.zeros((num_nodes, num_nodes), jnp.float32)
    a = a.at[dst, src].add(1.0)                          # messages src -> dst
    a = a + jnp.eye(num_nodes, dtype=jnp.float32)        # self-loops
    deg = jnp.sum(a, axis=1)
    dinv = jnp.where(deg > 0, jax.lax.rsqrt(deg), 0.0)
    return a * dinv[:, None] * dinv[None, :]


def build_pool_matrix(batch, num_graphs):
    """One-hot (G, N) matrix so that P @ x == global_add_pool(x, batch)."""
    return (batch[None, :] == jnp.arange(num_graphs)[:, None]).astype(jnp.float32)


def init_encoder_params(key, num_features, dim, num_gc_layers):
    params = []
    for i in range(num_gc_layers):
        in_dim = num_features if i == 0 else dim
        key, kw = jax.random.split(key)
        scale = jnp.sqrt(6.0 / (in_dim + dim))           # Glorot uniform
        w = jax.random.uniform(kw, (in_dim, dim), jnp.float32, -scale, scale)
        b = jnp.zeros((dim,), jnp.float32)
        gamma = jnp.ones((dim,), jnp.float32)
        beta = jnp.zeros((dim,), jnp.float32)
        params.append((w, b, gamma, beta))
    return params


def encoder_gcn_forward(x, edge_index, batch, params, num_graphs):
    n, f = x.shape
    dim = params[0][0].shape[1]
    num_layers = len(params)
    dpad = _round_up(max(f, dim), LANE)                  # lane-dense channels

    a_norm = build_normalized_adjacency(edge_index, n).astype(jnp.bfloat16)
    pool_mat = build_pool_matrix(batch, num_graphs)

    x_pad = jnp.zeros((n, dpad), jnp.float32).at[:, :f].set(x)

    # Stack & zero-pad all layers' parameters (passed to the kernel once).
    w_all = jnp.zeros((num_layers, dpad, dpad), jnp.float32)
    b_all = jnp.zeros((num_layers, 1, dpad), jnp.float32)
    gamma_all = jnp.zeros((num_layers, 1, dpad), jnp.float32)
    beta_all = jnp.zeros((num_layers, 1, dpad), jnp.float32)
    for i, (w, b, gamma, beta) in enumerate(params):
        in_dim = w.shape[0]
        w_all = w_all.at[i, :in_dim, :dim].set(w)
        b_all = b_all.at[i, 0, :dim].set(b)
        gamma_all = gamma_all.at[i, 0, :dim].set(gamma)
        beta_all = beta_all.at[i, 0, :dim].set(beta)

    pooled = _run_encoder(x_pad, a_norm, pool_mat, w_all, b_all, gamma_all,
                          beta_all)                      # (L, G, Dp)
    pooled = pooled[:, :, :dim]                          # drop channel padding
    return jnp.transpose(pooled, (1, 0, 2)).reshape(num_graphs,
                                                    num_layers * dim)


def encoder_gcn_reference(x, a_bf16, pool_mat, params):
    """Pure-JAX reference with matching bf16 matmul precision."""
    h = x
    pooled = []
    for (w, b, gamma, beta) in params:
        xw = jnp.dot(h, w, preferred_element_type=jnp.float32)
        hc = jnp.dot(a_bf16, xw.astype(jnp.bfloat16),
                     preferred_element_type=jnp.float32)
        hc = jnp.maximum(hc + b[None, :], 0.0)
        mean = jnp.mean(hc, axis=0, keepdims=True)
        var = jnp.mean((hc - mean) ** 2, axis=0, keepdims=True)
        y = (hc - mean) * jax.lax.rsqrt(var + EPS) * gamma[None, :] + beta[None, :]
        pooled.append(jnp.dot(pool_mat, y, preferred_element_type=jnp.float32))
        h = y
    return jnp.concatenate(pooled, axis=1)


if __name__ == "__main__":
    # 2 ring graphs of 8 nodes each, num_features=4, dim=32, 3 GCN layers.
    num_features = 4
    dim = 32
    num_gc_layers = 3
    nodes_per_graph = 8
    num_graphs = 2
    n = nodes_per_graph * num_graphs

    key = jax.random.PRNGKey(0)
    key, kx = jax.random.split(key)
    x = jax.random.normal(kx, (n, num_features), jnp.float32)

    src_list, dst_list = [], []
    for gidx in range(num_graphs):
        base = gidx * nodes_per_graph
        for i in range(nodes_per_graph):
            u = base + i
            v = base + (i + 1) % nodes_per_graph
            src_list += [u, v]
            dst_list += [v, u]
    edge_index = jnp.array([src_list, dst_list], dtype=jnp.int32)   # (2, E)

    batch = jnp.repeat(jnp.arange(num_graphs, dtype=jnp.int32), nodes_per_graph)

    params = init_encoder_params(key, num_features, dim, num_gc_layers)

    out = encoder_gcn_forward(x, edge_index, batch, params, num_graphs)
    out = jax.block_until_ready(out)

    assert out.shape == (num_graphs, num_gc_layers * dim), out.shape
    assert bool(jnp.all(jnp.isfinite(out)))

    # Cross-check against a pure-JAX reference (same matmul precision).
    a_bf16 = build_normalized_adjacency(edge_index, n).astype(jnp.bfloat16)
    pool_mat = build_pool_matrix(batch, num_graphs)
    ref = encoder_gcn_reference(x, a_bf16, pool_mat, params)
    max_err = float(jnp.max(jnp.abs(out - ref)))
    assert max_err < 5e-2, max_err

    print("KERNEL_OK")
</pallas_src>

<mosaic_0001>
module attributes {stable_mosaic.version = 11 : i64} {
  func.func @_encoder_kernel(%arg0: i32, %arg1: memref<16x128xf32, #tpu.memory_space<vmem>>, %arg2: memref<16x16xbf16, #tpu.memory_space<vmem>>, %arg3: memref<2x16xf32, #tpu.memory_space<vmem>>, %arg4: memref<1x128x128xf32, #tpu.memory_space<vmem>>, %arg5: memref<1x1x128xf32, #tpu.memory_space<vmem>>, %arg6: memref<1x1x128xf32, #tpu.memory_space<vmem>>, %arg7: memref<1x1x128xf32, #tpu.memory_space<vmem>>, %arg8: memref<1x2x128xf32, #tpu.memory_space<vmem>>, %arg9: memref<16x128xf32, #tpu.memory_space<vmem>>) attributes {dimension_semantics = [#tpu.dimension_semantics<arbitrary>], iteration_bounds = array<i64: 3>, scalar_prefetch = 0 : i64, scratch_operands = 1 : i64, tpu.core_type = #tpu.core_type<tc>, window_params = [{pipeline_mode = #tpu.pipeline_mode<synchronous>, transform_indices = @transform_0, window_bounds = array<i64: 16, 128>}, {pipeline_mode = #tpu.pipeline_mode<synchronous>, transform_indices = @transform_1, window_bounds = array<i64: 16, 16>}, {pipeline_mode = #tpu.pipeline_mode<synchronous>, transform_indices = @transform_2, window_bounds = array<i64: 2, 16>}, {transform_indices = @transform_3, window_bounds = array<i64: 1, 128, 128>}, {transform_indices = @transform_4, window_bounds = array<i64: 1, 1, 128>}, {transform_indices = @transform_5, window_bounds = array<i64: 1, 1, 128>}, {transform_indices = @transform_6, window_bounds = array<i64: 1, 1, 128>}, {transform_indices = @transform_7, window_bounds = array<i64: 1, 2, 128>}]} {
    %c0_i32 = arith.constant 0 : i32
    %0 = arith.cmpi eq, %arg0, %c0_i32 : i32
    %1 = arith.extui %0 : i1 to i32
    %c0_i32_0 = arith.constant 0 : i32
    %2 = arith.cmpi ne, %1, %c0_i32_0 : i32
    scf.if %2 {
      %c0_31 = arith.constant 0 : index
      %c0_32 = arith.constant 0 : index
      %47 = vector.load %arg1[%c0_31, %c0_32] : memref<16x128xf32, #tpu.memory_space<vmem>>, vector<16x128xf32>
      %c0_33 = arith.constant 0 : index
      %c0_34 = arith.constant 0 : index
      %48 = vector.load %arg9[%c0_33, %c0_34] : memref<16x128xf32, #tpu.memory_space<vmem>>, vector<16x128xf32>
      tpu.vector_store %arg9[%c0_33, %c0_34], %47 {strides = array<i32>} : memref<16x128xf32, #tpu.memory_space<vmem>>, vector<16x128xf32>,
    } else {
    }
    %c0 = arith.constant 0 : index
    %c0_1 = arith.constant 0 : index
    %3 = vector.load %arg9[%c0, %c0_1] : memref<16x128xf32, #tpu.memory_space<vmem>>, vector<16x128xf32>
    %c0_2 = arith.constant 0 : index
    %c0_3 = arith.constant 0 : index
    %c0_4 = arith.constant 0 : index
    %4 = vector.load %arg4[%c0_2, %c0_3, %c0_4] : memref<1x128x128xf32, #tpu.memory_space<vmem>>, vector<1x128x128xf32>
    %5 = vector.shape_cast %4 : vector<1x128x128xf32> to vector<128x128xf32>
    %cst = arith.constant dense<0.000000e+00> : vector<16x128xf32>
    %6 = tpu.matmul %3, %5, %cst {dimension_numbers = #tpu.dot_dimension_numbers<[1], [0], [0], [1], [0, 0, 1, 1], [], []>} : vector<16x128xf32>, vector<128x128xf32>, vector<16x128xf32> -> vector<16x128xf32>
    %c0_5 = arith.constant 0 : index
    %c0_6 = arith.constant 0 : index
    %7 = vector.load %arg2[%c0_5, %c0_6] : memref<16x16xbf16, #tpu.memory_space<vmem>>, vector<16x16xbf16>
    %8 = arith.truncf %6 : vector<16x128xf32> to vector<16x128xbf16>
    %cst_7 = arith.constant dense<0.000000e+00> : vector<16x128xf32>
    %9 = tpu.matmul %7, %8, %cst_7 {dimension_numbers = #tpu.dot_dimension_numbers<[1], [0], [0], [1], [0, 0, 1, 1], [], []>} : vector<16x16xbf16>, vector<16x128xbf16>, vector<16x128xf32> -> vector<16x128xf32>
    %c0_8 = arith.constant 0 : index
    %c0_9 = arith.constant 0 : index
    %c0_10 = arith.constant 0 : index
    %10 = vector.load %arg5[%c0_8, %c0_9, %c0_10] : memref<1x1x128xf32, #tpu.memory_space<vmem>>, vector<1x1x128xf32>
    %11 = vector.shape_cast %10 : vector<1x1x128xf32> to vector<1x128xf32>
    %12 = vector.broadcast %11 : vector<1x128xf32> to vector<16x128xf32>
    %13 = arith.addf %9, %12 : vector<16x128xf32>
    %cst_11 = arith.constant 0.000000e+00 : f32
    %14 = vector.broadcast %cst_11 : f32 to vector<16x128xf32>
    %15 = arith.maximumf %13, %14 : vector<16x128xf32>
    %cst_12 = arith.constant dense<0.000000e+00> : vector<128xf32>
    %16 = vector.multi_reduction <add>, %15, %cst_12 [0] : vector<16x128xf32> to vector<128xf32>
    %17 = vector.shape_cast %16 : vector<128xf32> to vector<1x128xf32>
    %cst_13 = arith.constant 1.600000e+01 : f32
    %18 = vector.broadcast %cst_13 : f32 to vector<1x128xf32>
    %19 = arith.divf %17, %18 : vector<1x128xf32>
    %20 = vector.broadcast %19 : vector<1x128xf32> to vector<16x128xf32>
    %21 = arith.subf %15, %20 : vector<16x128xf32>
    %22 = arith.mulf %21, %21 : vector<16x128xf32>
    %cst_14 = arith.constant dense<0.000000e+00> : vector<128xf32>
    %23 = vector.multi_reduction <add>, %22, %cst_14 [0] : vector<16x128xf32> to vector<128xf32>
    %24 = vector.shape_cast %23 : vector<128xf32> to vector<1x128xf32>
    %cst_15 = arith.constant 1.600000e+01 : f32
    %25 = vector.broadcast %cst_15 : f32 to vector<1x128xf32>
    %26 = arith.divf %24, %25 : vector<1x128xf32>
    %cst_16 = arith.constant 9.99999974E-6 : f32
    %27 = vector.broadcast %cst_16 : f32 to vector<1x128xf32>
    %28 = arith.addf %26, %27 : vector<1x128xf32>
    %29 = math.rsqrt %28 : vector<1x128xf32>
    %c0_17 = arith.constant 0 : index
    %c0_18 = arith.constant 0 : index
    %c0_19 = arith.constant 0 : index
    %30 = vector.load %arg6[%c0_17, %c0_18, %c0_19] : memref<1x1x128xf32, #tpu.memory_space<vmem>>, vector<1x1x128xf32>
    %31 = vector.shape_cast %30 : vector<1x1x128xf32> to vector<1x128xf32>
    %32 = arith.mulf %31, %29 : vector<1x128xf32>
    %c0_20 = arith.constant 0 : index
    %c0_21 = arith.constant 0 : index
    %c0_22 = arith.constant 0 : index
    %33 = vector.load %arg7[%c0_20, %c0_21, %c0_22] : memref<1x1x128xf32, #tpu.memory_space<vmem>>, vector<1x1x128xf32>
    %34 = vector.shape_cast %33 : vector<1x1x128xf32> to vector<1x128xf32>
    %35 = arith.mulf %19, %32 : vector<1x128xf32>
    %36 = arith.subf %34, %35 : vector<1x128xf32>
    %37 = vector.broadcast %32 : vector<1x128xf32> to vector<16x128xf32>
    %38 = arith.mulf %15, %37 : vector<16x128xf32>
    %39 = vector.broadcast %36 : vector<1x128xf32> to vector<16x128xf32>
    %40 = arith.addf %38, %39 : vector<16x128xf32>
    %c0_23 = arith.constant 0 : index
    %c0_24 = arith.constant 0 : index
    %41 = vector.load %arg9[%c0_23, %c0_24] : memref<16x128xf32, #tpu.memory_space<vmem>>, vector<16x128xf32>
    tpu.vector_store %arg9[%c0_23, %c0_24], %40 {strides = array<i32>} : memref<16x128xf32, #tpu.memory_space<vmem>>, vector<16x128xf32>,
    %c0_25 = arith.constant 0 : index
    %c0_26 = arith.constant 0 : index
    %42 = vector.load %arg3[%c0_25, %c0_26] : memref<2x16xf32, #tpu.memory_space<vmem>>, vector<2x16xf32>
    %cst_27 = arith.constant dense<0.000000e+00> : vector<2x128xf32>
    %43 = tpu.matmul %42, %40, %cst_27 {dimension_numbers = #tpu.dot_dimension_numbers<[1], [0], [0], [1], [0, 0, 1, 1], [], []>} : vector<2x16xf32>, vector<16x128xf32>, vector<2x128xf32> -> vector<2x128xf32>
    %c0_28 = arith.constant 0 : index
    %c0_29 = arith.constant 0 : index
    %c0_30 = arith.constant 0 : index
    %44 = vector.load %arg8[%c0_28, %c0_29, %c0_30] : memref<1x2x128xf32, #tpu.memory_space<vmem>>, vector<1x2x128xf32>
    %45 = vector.shape_cast %44 : vector<1x2x128xf32> to vector<2x128xf32>
    %46 = vector.shape_cast %43 : vector<2x128xf32> to vector<1x2x128xf32>
    tpu.vector_store %arg8[%c0_28, %c0_29, %c0_30], %46 {strides = array<i32>} : memref<1x2x128xf32, #tpu.memory_space<vmem>>, vector<1x2x128xf32>,
    return
  }
  func.func @transform_0(%arg0: i32) -> (i32, i32) {
    %c0_i32 = arith.constant 0 : i32
    %c0_i32_0 = arith.constant 0 : i32
    %c0_i32_1 = arith.constant 0 : i32
    return %c0_i32, %c0_i32_0 : i32, i32
  }
  func.func @transform_1(%arg0: i32) -> (i32, i32) {
    %c0_i32 = arith.constant 0 : i32
    %c0_i32_0 = arith.constant 0 : i32
    %c0_i32_1 = arith.constant 0 : i32
    return %c0_i32, %c0_i32_0 : i32, i32
  }
  func.func @transform_2(%arg0: i32) -> (i32, i32) {
    %c0_i32 = arith.constant 0 : i32
    %c0_i32_0 = arith.constant 0 : i32
    %c0_i32_1 = arith.constant 0 : i32
    return %c0_i32, %c0_i32_0 : i32, i32
  }
  func.func @transform_3(%arg0: i32) -> (i32, i32, i32) {
    %c0_i32 = arith.constant 0 : i32
    %c0_i32_0 = arith.constant 0 : i32
    %c0_i32_1 = arith.constant 0 : i32
    return %arg0, %c0_i32, %c0_i32_0 : i32, i32, i32
  }
  func.func @transform_4(%arg0: i32) -> (i32, i32, i32) {
    %c0_i32 = arith.constant 0 : i32
    %c0_i32_0 = arith.constant 0 : i32
    %c0_i32_1 = arith.constant 0 : i32
    return %arg0, %c0_i32, %c0_i32_0 : i32, i32, i32
  }
  func.func @transform_5(%arg0: i32) -> (i32, i32, i32) {
    %c0_i32 = arith.constant 0 : i32
    %c0_i32_0 = arith.constant 0 : i32
    %c0_i32_1 = arith.constant 0 : i32
    return %arg0, %c0_i32, %c0_i32_0 : i32, i32, i32
  }
  func.func @transform_6(%arg0: i32) -> (i32, i32, i32) {
    %c0_i32 = arith.constant 0 : i32
    %c0_i32_0 = arith.constant 0 : i32
    %c0_i32_1 = arith.constant 0 : i32
    return %arg0, %c0_i32, %c0_i32_0 : i32, i32, i32
  }
  func.func @transform_7(%arg0: i32) -> (i32, i32, i32) {
    %c0_i32 = arith.constant 0 : i32
    %c0_i32_0 = arith.constant 0 : i32
    %c0_i32_1 = arith.constant 0 : i32
    return %arg0, %c0_i32, %c0_i32_0 : i32, i32, i32
  }
}

</mosaic_0001>

<llo_original>
// kernel: _run_encoder_impl.1
$region0: #{_run_encoder_impl.1}
  #allocation0 [shape = 'u32[]', space=smem, size = 0x4, offset = 0x4, fixed_abs, tag = 'smem constant byte address 0x4 - core index']
  #allocation1 [shape = 'u32[144,128]{1,0:T(1,128)}', space=vmem, size = 0x12000, scoped, tag = 'internal scratch']
  #allocation2 [shape = 'f32[16,128]{1,0:T(8,128)}', space=vmem, size = 0x2000, scoped, tag = 'scratch operand']
  %s0 = inlined_call_operand.hbm [shape: f32[16,128], index: 0, kind: input, shape index: {}]
  %s1 = inlined_call_operand.hbm [shape: bf16[16,16], index: 1, kind: input, shape index: {}]
  %s2 = inlined_call_operand.hbm [shape: f32[2,16], index: 2, kind: input, shape index: {}]
  %s3 = inlined_call_operand.hbm [shape: f32[3,128,128], index: 3, kind: input, shape index: {}]
  %s4 = inlined_call_operand.vmem [shape: f32[3,1,128], index: 4, kind: input, shape index: {}]
  %s5 = inlined_call_operand.vmem [shape: f32[3,1,128], index: 5, kind: input, shape index: {}]
  %s6 = inlined_call_operand.vmem [shape: f32[3,1,128], index: 6, kind: input, shape index: {}]
  %s7 = inlined_call_operand.hbm [shape: f32[3,2,128], index: 7, kind: output, shape index: {}]
  %s8 = sld [smem:[#allocation0]]
  $region81: #{_run_encoder_impl.1} parent=0
    _
  %s10 = ssub.s32 1, %s8
  %s11 = scalar_select 0, %s10, %s8
  $region1: #{_run_encoder_impl.1} parent=0
    #allocation3 [shape = 'u8[8192]{0}', space=vmem, size = 0x2000, scoped, tag = 'input window, operand 0, single buffered']
    #allocation4 [shape = 's32[2]{0}', space=sflag, size = 0x8, scoped, tag = 'scoped memory for _run_encoder_impl.1']
    #allocation5 [shape = 's32[2]{0}', space=sflag, size = 0x8, scoped, tag = 'scoped memory for _run_encoder_impl.1']
    #allocation6 [shape = 'u8[4096]{0}', space=vmem, size = 0x1000, scoped, tag = 'input window, operand 1, single buffered']
    #allocation7 [shape = 's32[1]{0}', space=sflag, size = 0x4, scoped, tag = 'scoped memory for _run_encoder_impl.1']
    #allocation8 [shape = 'u8[1024]{0}', space=vmem, size = 0x400, scoped, tag = 'input window, operand 2, single buffered']
    #allocation9 [shape = 'u8[131072]{0}', space=vmem, size = 0x20000, scoped, tag = 'input window, operand 3']
    #allocation10 [shape = 's32[2]{0}', space=sflag, size = 0x8, scoped, tag = 'scoped memory for _run_encoder_impl.1']
    #allocation11 [shape = 'u8[2048]{0}', space=vmem, size = 0x800, scoped, tag = 'output window, operand 0']
    %12 = vsyncpa [#allocation4], 0
    %13 = vsyncpa [#allocation7], 0
    %14 = vsyncpa [#allocation10], 0
    %s15 = scalar_lea.sflag [#allocation10], 1
    %16 = vsyncpa %s15, 0
    %17 = vsyncpa [#allocation5], 0
    %s18 = scalar_lea.sflag [#allocation5], 1
    %19 = vsyncpa %s18, 0
    loop: start=0, step=1, limit=5
    $region2: #{_run_encoder_impl.1} parent=1 // loop_pre_header
      _
    $region3: #{_run_encoder_impl.1} parent=1 // loop_header
      %s21 = sphi 0, %s25
      %p22 = scmp.ge.s32.totalorder %s21, 5
      %s29 = sphi 0, %s29
      %s31 = sphi 0, %s29
      %s32 = sphi 0, %s31
      %s46 = sphi 0, %s32
      %s50 = sphi 0, %s50
      %s52 = sphi 0, %s50
      %s53 = sphi 0, %s52
      %s67 = sphi 0, %s53
      %s71 = sphi 0, %s71
      %s73 = sphi 0, %s71
      %s74 = sphi 0, %s73
      %s88 = sphi 0, %s74
      %s94 = sphi 0, %s96
      %s97 = sphi 0, %s94
      %s98 = sphi 0, %s97
      %s114 = sphi 0, %s98
      %s120 = sphi 0, %s122
      %s123 = sphi 0, %s120
      %s124 = sphi 0, %s123
      %s140 = sphi 0, %s124
      %s146 = sphi 0, %s148
      %s149 = sphi 0, %s146
      %s150 = sphi 0, %s149
      %s166 = sphi 0, %s150
      %s172 = sphi 0, %s174
      %s175 = sphi 0, %s172
      %s176 = sphi 0, %s175
      %s192 = sphi 0, %s176
      %s198 = sphi 0, %s200
      %s201 = sphi 0, %s198
      %s202 = sphi 0, %s201
      %s218 = sphi 0, %s202
    $region4: #{_run_encoder_impl.1} parent=1 // loop_header_branch
      %24 = sbr.rel (%p22) target = $region8
    $region5: #{_run_encoder_impl.1} parent=1 // loop_body
      %s26 = ssub.s32 %s21, 1
      %s27 = ssub.s32 %s21, 2
      %s28 = sadd.s32 %s21, 1
      %s30 = sadd.s32 %s29, 1
      %p33 = scmp.eq.s32.totalorder %s21, 2
      %p34 = scmp.ne.s32.totalorder %s29, %s31
      %p35 = scmp.eq.s32.totalorder %s21, 0
      %p36 = por %p34, %p35
      %p37 = scmp.ne.s32.totalorder %s29, %s31
      %p38 = scmp.eq.s32.totalorder %s26, 2
      %p39 = por %p37, %p38
      %p40 = scmp.ne.s32.totalorder %s31, %s32
      %p41 = scmp.eq.s32.totalorder %s26, 0
      %p42 = por %p40, %p41
      %p43 = scmp.ne.s32.totalorder %s31, %s32
      %p44 = scmp.eq.s32.totalorder %s27, 2
      %p45 = por %p43, %p44
      %p47 = scmp.ne.s32.totalorder %s32, %s46
      %p48 = scmp.eq.s32.totalorder %s27, 0
      %p49 = por %p47, %p48
      %s51 = sadd.s32 %s50, 1
      %p54 = scmp.eq.s32.totalorder %s21, 2
      %p55 = scmp.ne.s32.totalorder %s50, %s52
      %p56 = scmp.eq.s32.totalorder %s21, 0
      %p57 = por %p55, %p56
      %p58 = scmp.ne.s32.totalorder %s50, %s52
      %p59 = scmp.eq.s32.totalorder %s26, 2
      %p60 = por %p58, %p59
      %p61 = scmp.ne.s32.totalorder %s52, %s53
      %p62 = scmp.eq.s32.totalorder %s26, 0
      %p63 = por %p61, %p62
      %p64 = scmp.ne.s32.totalorder %s52, %s53
      %p65 = scmp.eq.s32.totalorder %s27, 2
      %p66 = por %p64, %p65
      %p68 = scmp.ne.s32.totalorder %s53, %s67
      %p69 = scmp.eq.s32.totalorder %s27, 0
      %p70 = por %p68, %p69
      %s72 = sadd.s32 %s71, 1
      %p75 = scmp.eq.s32.totalorder %s21, 2
      %p76 = scmp.ne.s32.totalorder %s71, %s73
      %p77 = scmp.eq.s32.totalorder %s21, 0
      %p78 = por %p76, %p77
      %p79 = scmp.ne.s32.totalorder %s71, %s73
      %p80 = scmp.eq.s32.totalorder %s26, 2
      %p81 = por %p79, %p80
      %p82 = scmp.ne.s32.totalorder %s73, %s74
      %p83 = scmp.eq.s32.totalorder %s26, 0
      %p84 = por %p82, %p83
      %p85 = scmp.ne.s32.totalorder %s73, %s74
      %p86 = scmp.eq.s32.totalorder %s27, 2
      %p87 = por %p85, %p86
      %p89 = scmp.ne.s32.totalorder %s74, %s88
      %p90 = scmp.eq.s32.totalorder %s27, 0
      %p91 = por %p89, %p90
      %s92 = ssub.s32 %s21, %s28
      %p93 = scmp.eq.s32.totalorder %s92, 0
      %s95 = sadd.s32 %s94, 1
      %s96 = scalar_select %p93, %s94, %s95
      %p99 = pneg %p93
      %p100 = scmp.eq.s32.totalorder %s21, 2
      %p101 = por %p99, %p100
      %p102 = scmp.ne.s32.totalorder %s94, %s97
      %p103 = scmp.eq.s32.totalorder %s21, 0
      %p104 = por %p102, %p103
      %p105 = scmp.ne.s32.totalorder %s94, %s97
      %p106 = scmp.eq.s32.totalorder %s26, 2
      %p107 = por %p105, %p106
      %p108 = scmp.ne.s32.totalorder %s97, %s98
      %p109 = scmp.eq.s32.totalorder %s26, 0
      %p110 = por %p108, %p109
      %p111 = scmp.ne.s32.totalorder %s97, %s98
      %p112 = scmp.eq.s32.totalorder %s27, 2
      %p113 = por %p111, %p112
      %p115 = scmp.ne.s32.totalorder %s98, %s114
      %p116 = scmp.eq.s32.totalorder %s27, 0
      %p117 = por %p115, %p116
      %s118 = ssub.s32 %s21, %s28
      %p119 = scmp.eq.s32.totalorder %s118, 0
      %s121 = sadd.s32 %s120, 1
      %s122 = scalar_select %p119, %s120, %s121
      %p125 = pneg %p119
      %p126 = scmp.eq.s32.totalorder %s21, 2
      %p127 = por %p125, %p126
      %p128 = scmp.ne.s32.totalorder %s120, %s123
      %p129 = scmp.eq.s32.totalorder %s21, 0
      %p130 = por %p128, %p129
      %p131 = scmp.ne.s32.totalorder %s120, %s123
      %p132 = scmp.eq.s32.totalorder %s26, 2
      %p133 = por %p131, %p132
      %p134 = scmp.ne.s32.totalorder %s123, %s124
      %p135 = scmp.eq.s32.totalorder %s26, 0
      %p136 = por %p134, %p135
      %p137 = scmp.ne.s32.totalorder %s123, %s124
      %p138 = scmp.eq.s32.totalorder %s27, 2
      %p139 = por %p137, %p138
      %p141 = scmp.ne.s32.totalorder %s124, %s140
      %p142 = scmp.eq.s32.totalorder %s27, 0
      %p143 = por %p141, %p142
      %s144 = ssub.s32 %s21, %s28
      %p145 = scmp.eq.s32.totalorder %s144, 0
      %s147 = sadd.s32 %s146, 1
      %s148 = scalar_select %p145, %s146, %s147
      %p151 = pneg %p145
      %p152 = scmp.eq.s32.totalorder %s21, 2
      %p153 = por %p151, %p152
      %p154 = scmp.ne.s32.totalorder %s146, %s149
      %p155 = scmp.eq.s32.totalorder %s21, 0
      %p156 = por %p154, %p155
      %p157 = scmp.ne.s32.totalorder %s146, %s149
      %p158 = scmp.eq.s32.totalorder %s26, 2
      %p159 = por %p157, %p158
      %p160 = scmp.ne.s32.totalorder %s149, %s150
      %p161 = scmp.eq.s32.totalorder %s26, 0
      %p162 = por %p160, %p161
      %p163 = scmp.ne.s32.totalorder %s149, %s150
      %p164 = scmp.eq.s32.totalorder %s27, 2
      %p165 = por %p163, %p164
      %p167 = scmp.ne.s32.totalorder %s150, %s166
      %p168 = scmp.eq.s32.totalorder %s27, 0
      %p169 = por %p167, %p168
      %s170 = ssub.s32 %s21, %s28
      %p171 = scmp.eq.s32.totalorder %s170, 0
      %s173 = sadd.s32 %s172, 1
      %s174 = scalar_select %p171, %s172, %s173
      %p177 = pneg %p171
      %p178 = scmp.eq.s32.totalorder %s21, 2
      %p179 = por %p177, %p178
      %p180 = scmp.ne.s32.totalorder %s172, %s175
      %p181 = scmp.eq.s32.totalorder %s21, 0
      %p182 = por %p180, %p181
      %p183 = scmp.ne.s32.totalorder %s172, %s175
      %p184 = scmp.eq.s32.totalorder %s26, 2
      %p185 = por %p183, %p184
      %p186 = scmp.ne.s32.totalorder %s175, %s176
      %p187 = scmp.eq.s32.totalorder %s26, 0
      %p188 = por %p186, %p187
      %p189 = scmp.ne.s32.totalorder %s175, %s176
      %p190 = scmp.eq.s32.totalorder %s27, 2
      %p191 = por %p189, %p190
      %p193 = scmp.ne.s32.totalorder %s176, %s192
      %p194 = scmp.eq.s32.totalorder %s27, 0
      %p195 = por %p193, %p194
      %s196 = ssub.s32 %s21, %s28
      %p197 = scmp.eq.s32.totalorder %s196, 0
      %s199 = sadd.s32 %s198, 1
      %s200 = scalar_select %p197, %s198, %s199
      %p203 = pneg %p197
      %p204 = scmp.eq.s32.totalorder %s21, 2
      %p205 = por %p203, %p204
      %p206 = scmp.ne.s32.totalorder %s198, %s201
      %p207 = scmp.eq.s32.totalorder %s21, 0
      %p208 = por %p206, %p207
      %p209 = scmp.ne.s32.totalorder %s198, %s201
      %p210 = scmp.eq.s32.totalorder %s26, 2
      %p211 = por %p209, %p210
      %p212 = scmp.ne.s32.totalorder %s201, %s202
      %p213 = scmp.eq.s32.totalorder %s26, 0
      %p214 = por %p212, %p213
      %p215 = scmp.ne.s32.totalorder %s201, %s202
      %p216 = scmp.eq.s32.totalorder %s27, 2
      %p217 = por %p215, %p216
      %p219 = scmp.ne.s32.totalorder %s202, %s218
      %p220 = scmp.eq.s32.totalorder %s27, 0
      %p221 = por %p219, %p220
      %p222 = scmp.le.s32.totalorder 1, %s21
      %p223 = scmp.lt.s32.totalorder %s21, 4
      %p224 = pnand %p222, %p223
      %p225 = pneg %p224
      // Predicated region
      $region9: #{_run_encoder_impl.1} parent=5 // pred_check
        _
      $region10: #{_run_encoder_impl.1} parent=5 // pred_check_branch
        %227 = sbr.rel (%p224) target = $region12
      $region11: #{_run_encoder_impl.1} parent=5 // pred_region
        %s228 = ssub.s32 %s21, 1
        // Predicated region
        $region13: #{_run_encoder_impl.1} parent=11 // pred_check
          %p229 = pneg %p42
        $region14: #{_run_encoder_impl.1} parent=11 // pred_check_branch
          %231 = sbr.rel (%p229) target = $region16
        $region15: #{_run_encoder_impl.1} parent=11 // pred_region
          %s233 = ssub.s32 256, 256
          %234 = vsyncadd [#allocation4], %s233
          %s235 = sshll.u32 [#allocation3], 4
          %s236 = int_to_ptr.vmem [resolvable:$true] %s235
          %241 = dma.hbm_to_vmem [thread:$0]  %s0, 256, %s236, [#allocation4], 128, 128, 8
        $region16: #{_run_encoder_impl.1} parent=11 // pred_fallthru
          _
        // Predicated region
        $region17: #{_run_encoder_impl.1} parent=11 // pred_check
          %p242 = pneg %p63
        $region18: #{_run_encoder_impl.1} parent=11 // pred_check_branch
          %244 = sbr.rel (%p242) target = $region20
        $region19: #{_run_encoder_impl.1} parent=11 // pred_region
          %s246 = ssub.s32 128, 128
          %247 = vsyncadd [#allocation7], %s246
          %s248 = sshll.u32 [#allocation6], 4
          %s249 = int_to_ptr.vmem [resolvable:$true] %s248
          %254 = dma.hbm_to_vmem [thread:$0]  %s1, 128, %s249, [#allocation7], 64, 64, 4
        $region20: #{_run_encoder_impl.1} parent=11 // pred_fallthru
          _
        // Predicated region
        $region21: #{_run_encoder_impl.1} parent=11 // pred_check
          %p255 = pneg %p84
        $region22: #{_run_encoder_impl.1} parent=11 // pred_check_branch
          %257 = sbr.rel (%p255) target = $region24
        $region23: #{_run_encoder_impl.1} parent=11 // pred_region
          %s259 = ssub.s32 32, 32
          %260 = vsyncadd [#allocation7], %s259
          %s262 = sshll.u32 [#allocation8], 4
          %s263 = int_to_ptr.vmem [resolvable:$true] %s262
          %265 = dma.hbm_to_vmem [thread:$0]  %s2, 32, %s263, [#allocation7]
        $region24: #{_run_encoder_impl.1} parent=11 // pred_fallthru
          _
      $region12: #{_run_encoder_impl.1} parent=5 // pred_fallthru
        _
      %p266 = scmp.lt.s32.totalorder %s21, 3
      // Predicated region
      $region25: #{_run_encoder_impl.1} parent=5 // pred_check
        %p267 = pneg %p266
      $region26: #{_run_encoder_impl.1} parent=5 // pred_check_branch
        %269 = sbr.rel (%p267) target = $region28
      $region27: #{_run_encoder_impl.1} parent=5 // pred_region
        // Predicated region
        $region29: #{_run_encoder_impl.1} parent=27 // pred_check
          %p270 = pneg %p104
        $region30: #{_run_encoder_impl.1} parent=27 // pred_check_branch
          %272 = sbr.rel (%p270) target = $region32
        $region31: #{_run_encoder_impl.1} parent=27 // pred_region
          %s273 = sand.u32 %s94, 1
          %s274 = scalar_lea.sflag [#allocation10], %s273
          %s275 = sand.u32 %s94, 1
          %s276 = smul.addr %s275, 128
          %s277 = scalar_lea.vmem [#allocation9], %s276
          %s279 = ssub.s32 2048, 2048
          %280 = vsyncadd %s274, %s279
          %s281 = smul.addr %s21, 16
          %s282 = smul.addr %s281, 128
          %s283 = scalar_lea.hbm %s3, %s282
          %s284 = sshll.u32 %s277, 4
          %s285 = int_to_ptr.vmem [resolvable:$true] %s284
          %290 = dma.hbm_to_vmem [thread:$0]  %s283, 2048, %s285, %s274, 128, 128, 8
        $region32: #{_run_encoder_impl.1} parent=27 // pred_fallthru
          _
        // Predicated region
        $region33: #{_run_encoder_impl.1} parent=27 // pred_check
          %p291 = pneg %p130
        $region34: #{_run_encoder_impl.1} parent=27 // pred_check_branch
          %293 = sbr.rel (%p291) target = $region36
        $region35: #{_run_encoder_impl.1} parent=27 // pred_region
          %p294 = scmp.lt.s32.totalorder %s21, 2
          %s295 = scalar_select %p294, %s21, 2
          %s296 = scalar_lea.vmem %s4, %s295
        $region36: #{_run_encoder_impl.1} parent=27 // pred_fallthru
          _
        // Predicated region
        $region37: #{_run_encoder_impl.1} parent=27 // pred_check
          %p297 = pneg %p156
        $region38: #{_run_encoder_impl.1} parent=27 // pred_check_branch
          %299 = sbr.rel (%p297) target = $region40
        $region39: #{_run_encoder_impl.1} parent=27 // pred_region
          %p300 = scmp.lt.s32.totalorder %s21, 2
          %s301 = scalar_select %p300, %s21, 2
          %s302 = scalar_lea.vmem %s5, %s301
        $region40: #{_run_encoder_impl.1} parent=27 // pred_fallthru
          _
        // Predicated region
        $region41: #{_run_encoder_impl.1} parent=27 // pred_check
          %p303 = pneg %p182
        $region42: #{_run_encoder_impl.1} parent=27 // pred_check_branch
          %305 = sbr.rel (%p303) target = $region44
        $region43: #{_run_encoder_impl.1} parent=27 // pred_region
          %p306 = scmp.lt.s32.totalorder %s21, 2
          %s307 = scalar_select %p306, %s21, 2
          %s308 = scalar_lea.vmem %s6, %s307
        $region44: #{_run_encoder_impl.1} parent=27 // pred_fallthru
          _
      $region28: #{_run_encoder_impl.1} parent=5 // pred_fallthru
        _
      %p309 = scmp.le.s32.totalorder 1, %s21
      %p310 = scmp.lt.s32.totalorder %s21, 4
      %p311 = pnand %p309, %p310
      %p312 = pneg %p311
      // Predicated region
      $region45: #{_run_encoder_impl.1} parent=5 // pred_check
        _
      $region46: #{_run_encoder_impl.1} parent=5 // pred_check_branch
        %314 = sbr.rel (%p311) target = $region48
      $region47: #{_run_encoder_impl.1} parent=5 // pred_region
        %s315 = ssub.s32 %s21, 1
        // Predicated region
        $region49: #{_run_encoder_impl.1} parent=47 // pred_check
          %p316 = pneg %p42
        $region50: #{_run_encoder_impl.1} parent=47 // pred_check_branch
          %318 = sbr.rel (%p316) target = $region52
        $region51: #{_run_encoder_impl.1} parent=47 // pred_region
          %319 = dma.done [#allocation4], 256
        $region52: #{_run_encoder_impl.1} parent=47 // pred_fallthru
          _
        // Predicated region
        $region53: #{_run_encoder_impl.1} parent=47 // pred_check
          %p320 = pneg %p63
        $region54: #{_run_encoder_impl.1} parent=47 // pred_check_branch
          %322 = sbr.rel (%p320) target = $region56
        $region55: #{_run_encoder_impl.1} parent=47 // pred_region
          %323 = dma.done [#allocation7], 128
        $region56: #{_run_encoder_impl.1} parent=47 // pred_fallthru
          _
        // Predicated region
        $region57: #{_run_encoder_impl.1} parent=47 // pred_check
          %p324 = pneg %p84
        $region58: #{_run_encoder_impl.1} parent=47 // pred_check_branch
          %326 = sbr.rel (%p324) target = $region60
        $region59: #{_run_encoder_impl.1} parent=47 // pred_region
          %327 = dma.done [#allocation7], 32
        $region60: #{_run_encoder_impl.1} parent=47 // pred_fallthru
          _
        %s328 = sand.u32 %s97, 1
        %s329 = scalar_lea.sflag [#allocation10], %s328
        %s330 = sand.u32 %s97, 1
        %s331 = smul.addr %s330, 128
        %s332 = scalar_lea.vmem [#allocation9], %s331
        // Predicated region
        $region61: #{_run_encoder_impl.1} parent=47 // pred_check
          %p333 = pneg %p110
        $region62: #{_run_encoder_impl.1} parent=47 // pred_check_branch
          %335 = sbr.rel (%p333) target = $region64
        $region63: #{_run_encoder_impl.1} parent=47 // pred_region
          %336 = dma.done %s329, 2048
        $region64: #{_run_encoder_impl.1} parent=47 // pred_fallthru
          _
        %p337 = pneg %p42
        %p338 = pneg %p39
        %p339 = pneg %p63
        %p340 = pneg %p60
        %p341 = pneg %p84
        %p342 = pneg %p81
        %s343 = sand.u32 %s97, 1
        %s344 = scalar_lea.sflag [#allocation10], %s343
        %s345 = sand.u32 %s97, 1
        %s346 = smul.addr %s345, 128
        %s347 = scalar_lea.vmem [#allocation9], %s346
        %p348 = pneg %p110
        %p349 = pneg %p107
        %p350 = scmp.lt.s32.totalorder %s26, 2
        %s351 = scalar_select %p350, %s26, 2
        %s352 = scalar_lea.vmem %s4, %s351
        %p353 = pneg %p136
        %p354 = pneg %p133
        %p355 = scmp.lt.s32.totalorder %s26, 2
        %s356 = scalar_select %p355, %s26, 2
        %s357 = scalar_lea.vmem %s5, %s356
        %p358 = pneg %p162
        %p359 = pneg %p159
        %p360 = scmp.lt.s32.totalorder %s26, 2
        %s361 = scalar_select %p360, %s26, 2
        %s362 = scalar_lea.vmem %s6, %s361
        %p363 = pneg %p188
        %p364 = pneg %p185
        %p365 = pneg %p214
        %p366 = pneg %p211
        %s367 = sand.u32 %s201, 1
        %s368 = scalar_lea.sflag [#allocation5], %s367
        %s369 = sand.u32 %s201, 1
        %s370 = smul.addr %s369, 2
        %s371 = scalar_lea.vmem [#allocation11], %s370
        %p372 = scmp.lt.s32.totalorder %s26, 2
        %s373 = scalar_select %p372, %s26, 2
        %s374 = scalar_lea.vmem %s4, %s373
        %p375 = scmp.lt.s32.totalorder %s26, 2
        %s376 = scalar_select %p375, %s26, 2
        %s377 = scalar_lea.vmem %s5, %s376
        %p378 = scmp.lt.s32.totalorder %s26, 2
        %s379 = scalar_select %p378, %s26, 2
        %s380 = scalar_lea.vmem %s6, %s379
        %p382 = scmp.eq.s32.totalorder %s26, 0
        // Predicated region
        $region65: #{_run_encoder_impl.1} parent=47 // pred_check
          %p383 = pneg %p382
        $region66: #{_run_encoder_impl.1} parent=47 // pred_check_branch
          %385 = sbr.rel (%p383) target = $region68
        $region67: #{_run_encoder_impl.1} parent=47 // pred_region
          %v386 = vld [vmem:[#allocation3] sm:$0xff]
          %v387 = vld [vmem:[#allocation3 + $0x8] sm:$0xff]
          %388 = vst [vmem:[#allocation2] sm:$0xff] %v386
          %389 = vst [vmem:[#allocation2 + $0x8] sm:$0xff] %v387
        $region68: #{_run_encoder_impl.1} parent=47 // pred_fallthru
          _
        %v390 = vld [vmem:[#allocation2] sm:$0xff]
        %v391 = vld [vmem:[#allocation2 + $0x8] sm:$0xff]
        %v392 = vld [vmem:[%s332] sm:$0xff]
        %v393 = vld [vmem:[%s332 + $0x8] sm:$0xff]
        %v394 = vld [vmem:[%s332 + $0x10] sm:$0xff]
        %v395 = vld [vmem:[%s332 + $0x18] sm:$0xff]
        %v396 = vld [vmem:[%s332 + $0x20] sm:$0xff]
        %v397 = vld [vmem:[%s332 + $0x28] sm:$0xff]
        %v398 = vld [vmem:[%s332 + $0x30] sm:$0xff]
        %v399 = vld [vmem:[%s332 + $0x38] sm:$0xff]
        %v400 = vld [vmem:[%s332 + $0x40] sm:$0xff]
        %v401 = vld [vmem:[%s332 + $0x48] sm:$0xff]
        %v402 = vld [vmem:[%s332 + $0x50] sm:$0xff]
        %v403 = vld [vmem:[%s332 + $0x58] sm:$0xff]
        %v404 = vld [vmem:[%s332 + $0x60] sm:$0xff]
        %v405 = vld [vmem:[%s332 + $0x68] sm:$0xff]
        %v406 = vld [vmem:[%s332 + $0x70] sm:$0xff]
        %v407 = vld [vmem:[%s332 + $0x78] sm:$0xff]
        %408 = vmatprep.subr.mxu0 0.0
        %409 = vmatpush1.msra.mxu0 %v392
        %410 = vmatprep.subr.mxu0 0.0
        %411 = vmatpush1.msra.mxu0 %v393
        %412 = vmatprep.subr.mxu0 0.0
        %413 = vmatpush1.msra.mxu0 %v394
        %414 = vmatprep.subr.mxu0 0.0
        %415 = vmatpush1.msra.mxu0 %v395
        %416 = vmatprep.subr.mxu0 0.0
        %417 = vmatpush1.msra.mxu0 %v396
        %418 = vmatprep.subr.mxu0 0.0
        %419 = vmatpush1.msra.mxu0 %v397
        %420 = vmatprep.subr.mxu0 0.0
        %421 = vmatpush1.msra.mxu0 %v398
        %422 = vmatprep.subr.mxu0 0.0
        %423 = vmatpush1.msra.mxu0 %v399
        %424 = vmatprep.subr.mxu0 0.0
        %425 = vmatpush1.msra.mxu0 %v400
        %426 = vmatprep.subr.mxu0 0.0
        %427 = vmatpush1.msra.mxu0 %v401
        %428 = vmatprep.subr.mxu0 0.0
        %429 = vmatpush1.msra.mxu0 %v402
        %430 = vmatprep.subr.mxu0 0.0
        %431 = vmatpush1.msra.mxu0 %v403
        %432 = vmatprep.subr.mxu0 0.0
        %433 = vmatpush1.msra.mxu0 %v404
        %434 = vmatprep.subr.mxu0 0.0
        %435 = vmatpush1.msra.mxu0 %v405
        %436 = vmatprep.subr.mxu0 0.0
        %437 = vmatpush1.msra.mxu0 %v406
        %438 = vmatprep.subr.mxu0 0.0
        %439 = vmatpush1.msra.mxu0 %v407
        %440 = vmatprep.subr.mxu0 0.0
        %441 = vmatpush1.msra.mxu0 0.0
        %442 = vmatprep.subr.mxu0 0.0
        %443 = vmatpush1.msra.mxu0 0.0
        %444 = vmatprep.subr.mxu0 0.0
        %445 = vmatpush1.msra.mxu0 0.0
        %446 = vmatprep.subr.mxu0 0.0
        %447 = vmatpush1.msra.mxu0 0.0
        %448 = vmatprep.subr.mxu0 0.0
        %449 = vmatpush1.msra.mxu0 0.0
        %450 = vmatprep.subr.mxu0 0.0
        %451 = vmatpush1.msra.mxu0 0.0
        %452 = vmatprep.subr.mxu0 0.0
        %453 = vmatpush1.msra.mxu0 0.0
        %454 = vmatprep.subr.mxu0 0.0
        %455 = vmatpush1.msra.mxu0 0.0
        %456 = vmatprep.subr.mxu0 0.0
        %457 = vmatpush1.msra.mxu0 0.0
        %458 = vmatprep.subr.mxu0 0.0
        %459 = vmatpush1.msra.mxu0 0.0
        %460 = vmatprep.subr.mxu0 0.0
        %461 = vmatpush1.msra.mxu0 0.0
        %462 = vmatprep.subr.mxu0 0.0
        %463 = vmatpush1.msra.mxu0 0.0
        %464 = vmatprep.subr.mxu0 0.0
        %465 = vmatpush1.msra.mxu0 0.0
        %466 = vmatprep.subr.mxu0 0.0
        %467 = vmatpush1.msra.mxu0 0.0
        %468 = vmatprep.subr.mxu0 0.0
        %469 = vmatpush1.msra.mxu0 0.0
        %470 = vmatprep.subr.mxu0 0.0
        %471 = vmatpush1.msra.mxu0 0.0
        %472 = vmatprep.mubr.f32.mxu0 0.0
        %473 = vmatmul.mubr.f32.gmra.mrb[0].mxu0 %v390
        %v474 = vpop.f32.mrb[0].mxu0
        %v475 = vadd.f32 0.0, %v474
        %v476 = vpop.f32.mrb[0].mxu0
        %477 = vmatprep.mubr.f32.mxu0 0.0
        %478 = vmatmul.mubr.f32.gmra.mrb[0].mxu0 %v391
        %v479 = vpop.f32.mrb[0].mxu0
        %v480 = vadd.f32 0.0, %v479
        %v481 = vpop.f32.mrb[0].mxu0
        %482 = vdwg.mxu0
        %v483 = vld [vmem:[#allocation6] sm:$0xf]
        %v484 = vld [vmem:[#allocation6 + $0x4] sm:$0xf]
        %v485 = vpack.c.bf16 %v480, %v475
        %v486 = vld [vmem:[%s374] sm:$0x1]
        %v488 = vlaneseq
        %v489 = vshrl.u32 %v488, 7
        %v490 = vsub.s32 0, %v489
        %v491 = vrot.slane %v486, %v490
        %v495 = vunpack.c.l.b16 %v483
        %v496 = vunpack.c.l.b16 %v484
        %v497 = vpack.c.b16 %v496, %v495
        %vm498 = vcmask 130048
        %v500 = vsel %vm498, %v497, 0
        %502 = vmatprep.subr.bf16.mxu0 0
        %503 = vmatpush1.bf16.msra.mxu0 %v485
        %504 = vmatprep.subr.bf16.mxu0 0
        %505 = vmatpush1.bf16.msra.mxu0 0
        %506 = vmatprep.subr.bf16.mxu0 0
        %507 = vmatpush1.bf16.msra.mxu0 0
        %508 = vmatprep.subr.bf16.mxu0 0
        %509 = vmatpush1.bf16.msra.mxu0 0
        %510 = vmatprep.subr.bf16.mxu0 0
        %511 = vmatpush1.bf16.msra.mxu0 0
        %512 = vmatprep.subr.bf16.mxu0 0
        %513 = vmatpush1.bf16.msra.mxu0 0
        %514 = vmatprep.subr.bf16.mxu0 0
        %515 = vmatpush1.bf16.msra.mxu0 0
        %516 = vmatprep.subr.bf16.mxu0 0
        %517 = vmatpush1.bf16.msra.mxu0 0
        %518 = vmatprep.subr.bf16.mxu0 0
        %519 = vmatpush1.bf16.msra.mxu0 0
        %520 = vmatprep.subr.bf16.mxu0 0
        %521 = vmatpush1.bf16.msra.mxu0 0
        %522 = vmatprep.subr.bf16.mxu0 0
        %523 = vmatpush1.bf16.msra.mxu0 0
        %524 = vmatprep.subr.bf16.mxu0 0
        %525 = vmatpush1.bf16.msra.mxu0 0
        %526 = vmatprep.subr.bf16.mxu0 0
        %527 = vmatpush1.bf16.msra.mxu0 0
        %528 = vmatprep.subr.bf16.mxu0 0
        %529 = vmatpush1.bf16.msra.mxu0 0
        %530 = vmatprep.subr.bf16.mxu0 0
        %531 = vmatpush1.bf16.msra.mxu0 0
        %532 = vmatprep.subr.bf16.mxu0 0
        %533 = vmatpush1.bf16.msra.mxu0 0
        %534 = vmatprep.mubr.bf16.mxu0 0
        %535 = vmatmul.mubr.bf16.gmra.mrb[0].mxu0 %v500
        %v536 = vpop.f32.mrb[0].mxu0
        %v537 = vadd.f32 %v491, %v536
        %v538 = vpop.f32.mrb[0].mxu0
        %v539 = vpop.f32.mrb[0].mxu0
        %v540 = vadd.f32 %v491, %v539
        %v541 = vpop.f32.mrb[0].mxu0
        %542 = vdwg.mxu0
        %v543 = vmax.f32 %v537, 0.0
        %v544 = vmax.f32 %v540, 0.0
        %v545 = vadd.f32 %v543, %v544
        %v546 = vrot.slane %v545, 4
        %v547 = vadd.f32 %v545, %v546
        %v548 = vrot.slane %v547, 2
        %v549 = vadd.f32 %v547, %v548
        %v550 = vrot.slane %v549, 1
        %v551 = vadd.f32 %v549, %v550
        %v552 = vrcp.pop 16.0
        %v553 = vmul.f32 %v551, %v552
        %v554 = vsub.f32 %v543, %v553
        %v555 = vsub.f32 %v544, %v553
        %v556 = vmul.f32 %v554, %v554
        %v557 = vmul.f32 %v555, %v555
        %v558 = vadd.f32 %v556, %v557
        %v559 = vrot.slane %v558, 4
        %v560 = vadd.f32 %v558, %v559
        %v561 = vrot.slane %v560, 2
        %v562 = vadd.f32 %v560, %v561
        %v563 = vrot.slane %v562, 1
        %v564 = vadd.f32 %v562, %v563
        %v565 = vmul.f32 %v564, %v552
        %v566 = vadd.f32 %v565, 1e-05
        %v567 = vrsqrt.pop %v566
        %v568 = vld [vmem:[%s377] sm:$0x1]
        %v569 = vmul.f32 %v568, %v567
        %v570 = vld [vmem:[%s380] sm:$0x1]
        %v571 = vmul.f32 %v553, %v569
        %v572 = vsub.f32 %v570, %v571
        %v574 = vlaneseq
        %v575 = vshrl.u32 %v574, 7
        %v576 = vsub.s32 0, %v575
        %v577 = vrot.slane %v569, %v576
        %v579 = vmul.f32 %v543, %v577
        %v580 = vmul.f32 %v544, %v577
        %v582 = vlaneseq
        %v583 = vshrl.u32 %v582, 7
        %v584 = vsub.s32 0, %v583
        %v585 = vrot.slane %v572, %v584
        %v587 = vadd.f32 %v579, %v585
        %v588 = vadd.f32 %v580, %v585
        %589 = vst [vmem:[#allocation2] sm:$0xff] %v587
        %590 = vst [vmem:[#allocation2 + $0x8] sm:$0xff] %v588
        %v591 = vld [vmem:[#allocation8] sm:$0x3]
        %v593 = vsel %vm498, %v591, 0
        %595 = vmatprep.subr.mxu0 0.0
        %596 = vmatpush1.msra.mxu0 %v587
        %597 = vmatprep.subr.mxu0 0.0
        %598 = vmatpush1.msra.mxu0 %v588
        %599 = vmatprep.subr.mxu0 0.0
        %600 = vmatpush1.msra.mxu0 0.0
        %601 = vmatprep.subr.mxu0 0.0
        %602 = vmatpush1.msra.mxu0 0.0
        %603 = vmatprep.subr.mxu0 0.0
        %604 = vmatpush1.msra.mxu0 0.0
        %605 = vmatprep.subr.mxu0 0.0
        %606 = vmatpush1.msra.mxu0 0.0
        %607 = vmatprep.subr.mxu0 0.0
        %608 = vmatpush1.msra.mxu0 0.0
        %609 = vmatprep.subr.mxu0 0.0
        %610 = vmatpush1.msra.mxu0 0.0
        %611 = vmatprep.subr.mxu0 0.0
        %612 = vmatpush1.msra.mxu0 0.0
        %613 = vmatprep.subr.mxu0 0.0
        %614 = vmatpush1.msra.mxu0 0.0
        %615 = vmatprep.subr.mxu0 0.0
        %616 = vmatpush1.msra.mxu0 0.0
        %617 = vmatprep.subr.mxu0 0.0
        %618 = vmatpush1.msra.mxu0 0.0
        %619 = vmatprep.subr.mxu0 0.0
        %620 = vmatpush1.msra.mxu0 0.0
        %621 = vmatprep.subr.mxu0 0.0
        %622 = vmatpush1.msra.mxu0 0.0
        %623 = vmatprep.subr.mxu0 0.0
        %624 = vmatpush1.msra.mxu0 0.0
        %625 = vmatprep.subr.mxu0 0.0
        %626 = vmatpush1.msra.mxu0 0.0
        %627 = vmatprep.subr.mxu0 0.0
        %628 = vmatpush1.msra.mxu0 0.0
        %629 = vmatprep.subr.mxu0 0.0
        %630 = vmatpush1.msra.mxu0 0.0
        %631 = vmatprep.subr.mxu0 0.0
        %632 = vmatpush1.msra.mxu0 0.0
        %633 = vmatprep.subr.mxu0 0.0
        %634 = vmatpush1.msra.mxu0 0.0
        %635 = vmatprep.subr.mxu0 0.0
        %636 = vmatpush1.msra.mxu0 0.0
        %637 = vmatprep.subr.mxu0 0.0
        %638 = vmatpush1.msra.mxu0 0.0
        %639 = vmatprep.subr.mxu0 0.0
        %640 = vmatpush1.msra.mxu0 0.0
        %641 = vmatprep.subr.mxu0 0.0
        %642 = vmatpush1.msra.mxu0 0.0
        %643 = vmatprep.subr.mxu0 0.0
        %644 = vmatpush1.msra.mxu0 0.0
        %645 = vmatprep.subr.mxu0 0.0
        %646 = vmatpush1.msra.mxu0 0.0
        %647 = vmatprep.subr.mxu0 0.0
        %648 = vmatpush1.msra.mxu0 0.0
        %649 = vmatprep.subr.mxu0 0.0
        %650 = vmatpush1.msra.mxu0 0.0
        %651 = vmatprep.subr.mxu0 0.0
        %652 = vmatpush1.msra.mxu0 0.0
        %653 = vmatprep.subr.mxu0 0.0
        %654 = vmatpush1.msra.mxu0 0.0
        %655 = vmatprep.subr.mxu0 0.0
        %656 = vmatpush1.msra.mxu0 0.0
        %657 = vmatprep.subr.mxu0 0.0
        %658 = vmatpush1.msra.mxu0 0.0
        %659 = vmatprep.mubr.f32.mxu0 0.0
        %660 = vmatmul.mubr.f32.gmra.mrb[0].mxu0 %v593
        %v661 = vpop.f32.mrb[0].mxu0
        %v662 = vadd.f32 0.0, %v661
        %v663 = vpop.f32.mrb[0].mxu0
        %664 = vdwg.mxu0
        %665 = vst [vmem:[%s371] sm:$0x3] %v662
        %s666 = sand.u32 %s201, 1
        %s667 = scalar_lea.sflag [#allocation5], %s666
        %s668 = sand.u32 %s201, 1
        %s669 = smul.addr %s668, 2
        %s670 = scalar_lea.vmem [#allocation11], %s669
        // Predicated region
        $region69: #{_run_encoder_impl.1} parent=47 // pred_check
          %p671 = pneg %p211
        $region70: #{_run_encoder_impl.1} parent=47 // pred_check_branch
          %673 = sbr.rel (%p671) target = $region72
        $region71: #{_run_encoder_impl.1} parent=47 // pred_region
          %s675 = ssub.s32 32, 32
          %676 = vsyncadd %s667, %s675
          %s677 = smul.addr %s26, 32
          %s678 = scalar_lea.hbm %s7, %s677
          %s680 = sshll.u32 %s670, 4
          %s681 = int_to_ptr.vmem [resolvable:$true] %s680
          %683 = dma.vmem_to_hbm [thread:$0]  %s681, 32, %s678, %s667
        $region72: #{_run_encoder_impl.1} parent=47 // pred_fallthru
          _
      $region48: #{_run_encoder_impl.1} parent=5 // pred_fallthru
        _
      %p684 = scmp.le.s32.totalorder 2, %s21
      // Predicated region
      $region73: #{_run_encoder_impl.1} parent=5 // pred_check
        %p685 = pneg %p684
      $region74: #{_run_encoder_impl.1} parent=5 // pred_check_branch
        %687 = sbr.rel (%p685) target = $region76
      $region75: #{_run_encoder_impl.1} parent=5 // pred_region
        %s688 = ssub.s32 %s21, 2
        // Predicated region
        $region77: #{_run_encoder_impl.1} parent=75 // pred_check
          %p689 = pneg %p217
        $region78: #{_run_encoder_impl.1} parent=75 // pred_check_branch
          %691 = sbr.rel (%p689) target = $region80
        $region79: #{_run_encoder_impl.1} parent=75 // pred_region
          %s692 = sand.u32 %s202, 1
          %s693 = scalar_lea.sflag [#allocation5], %s692
          %s694 = sand.u32 %s202, 1
          %s695 = smul.addr %s694, 2
          %s696 = scalar_lea.vmem [#allocation11], %s695
          %697 = dma.done %s693, 32
        $region80: #{_run_encoder_impl.1} parent=75 // pred_fallthru
          _
      $region76: #{_run_encoder_impl.1} parent=5 // pred_fallthru
        _
    $region6: #{_run_encoder_impl.1} parent=1 // loop_footer
      %s25 = sadd.s32 1, %s21
    $region7: #{_run_encoder_impl.1} parent=1 // loop_footer_branch
      %20 = sbr.rel target = $region3
    $region8: #{_run_encoder_impl.1} parent=1 // loop_exit
      _
    %698 = vsyncpa [#allocation4], 1
    %s699 = scalar_lea.sflag [#allocation4], 1
    %700 = vsyncpa %s699, 1
    %701 = vsyncpa [#allocation7], 1
    %702 = vsyncpa [#allocation10], 1
    %s703 = scalar_lea.sflag [#allocation10], 1
    %704 = vsyncpa %s703, 1
    %705 = vsyncpa [#allocation5], 1
    %s706 = scalar_lea.sflag [#allocation5], 1
    %707 = vsyncpa %s706, 1

</llo_original>
